<compile_context>
chip_gen: v6e
topology: v6e:2x2x1
jax: 0.10.0
libtpu: 0.0.40
codegen_flags: <defaults>
</compile_context>

<pallas_src>
import functools

import jax
import jax.numpy as jnp
from jax.experimental import pallas as pl
from jax.experimental.pallas import tpu as pltpu


def _round_up(x, m):
    return ((x + m - 1) // m) * m


def _cel_sigmoid_kernel(x_ref, t_ref, wpos_ref, wneg_ref, out_ref, *,
                        valid_rows, tb, ragged):
    """One row-tile: weighted BCE-with-logits, reduced over rows to (1, L)."""
    x = x_ref[...].astype(jnp.float32)   # (tb, L)
    t = t_ref[...].astype(jnp.float32)   # (tb, L)

    # F.binary_cross_entropy_with_logits(x, t, reduction='none'),
    # numerically stable form: max(x, 0) - x*t + log1p(exp(-|x|))
    loss = jnp.maximum(x, 0.0) - x * t + jnp.log1p(jnp.exp(-jnp.abs(x)))

    # ratio2weight: targets_mask = (t > 0.5);
    #   weight = exp(mask*(1-ratio) + (1-mask)*ratio)
    # = per-class select between exp(1-ratio) and exp(ratio) (precomputed,
    # (1, L) rows broadcast over the tile).  The `weights[mask > 1] = 0`
    # branch of the PyTorch code is dead (mask is provably in {0, 1}).
    weight = jnp.where(t > 0.5, wpos_ref[...], wneg_ref[...])
    wl = loss * weight

    if ragged:
        # Last tile reads past the end of the array; those rows hold
        # unspecified data.  Select (not multiply) so NaN/Inf cannot leak in.
        row = pl.program_id(0) * tb + jax.lax.broadcasted_iota(
            jnp.int32, wl.shape, 0)
        wl = jnp.where(row < valid_rows, wl, 0.0)

    # Per-tile partial sum over rows (XLU slot, idle otherwise); the tiny
    # lane-axis reduction happens once in the wrapper.
    out_ref[...] = jnp.sum(wl, axis=0, keepdims=True)[None]


def cel_sigmoid_loss(logits, targets, sample_weight=None, *,
                     size_average=True, block_bytes=4 * 1024 * 1024):
    """Pallas TPU implementation of CEL_Sigmoid.forward.

    logits, targets: (B, C).  sample_weight: (C,) positive-label ratio (or
    None).  Returns scalar float32 loss = sum(weighted BCE) / B (size_average)
    or plain sum.
    """
    B, C = logits.shape
    n = B * C
    itemsize = max(jnp.dtype(logits.dtype).itemsize,
                   jnp.dtype(targets.dtype).itemsize)
    pack = {4: 8, 2: 16, 1: 32}.get(itemsize, 8)

    if sample_weight is None:
        w_pos = jnp.ones((1, C), jnp.float32)
        w_neg = jnp.ones((1, C), jnp.float32)
    else:
        ratio = jnp.asarray(sample_weight, jnp.float32).reshape(1, C)
        w_pos = jnp.exp(1.0 - ratio)   # weight where target > 0.5
        w_neg = jnp.exp(ratio)         # weight where target <= 0.5

    # ---- layout: lane-dense flatten (free contiguous reshape, no HBM copy)
    # when the per-class weight pattern tiles a 128-lane row exactly and the
    # flat length is 128-divisible; otherwise keep the natural (B, C) layout
    # (already lane-dense whenever C % 128 == 0).
    if 128 % C == 0 and n % 128 == 0:
        lanes = 128
        reps = lanes // C
        w_pos = jnp.tile(w_pos, (1, reps))
        w_neg = jnp.tile(w_neg, (1, reps))
        rows = n // lanes
        x2 = logits.reshape(rows, lanes)
        t2 = targets.reshape(rows, lanes)
    else:
        lanes = C
        rows = B
        x2 = logits
        t2 = targets

    # ---- row-tile size from the actual input dtype and lane padding,
    # sublane-pack aligned; clamp to the full row count (block == full dim).
    vmem_lanes = _round_up(lanes, 128)
    tb = block_bytes // (itemsize * vmem_lanes)
    tb = max(pack, (tb // pack) * pack)
    if tb >= rows:
        tb = rows
    grid = pl.cdiv(rows, tb)
    ragged = (rows % tb) != 0

    kernel = functools.partial(_cel_sigmoid_kernel, valid_rows=rows, tb=tb,
                               ragged=ragged)

    cost = pl.CostEstimate(
        flops=10 * n,
        transcendentals=2 * n,
        bytes_accessed=2 * n * itemsize + 8 * lanes + 4 * grid * lanes,
    )

    partials = pl.pallas_call(
        kernel,
        out_shape=jax.ShapeDtypeStruct((grid, 1, lanes), jnp.float32),
        grid_spec=pltpu.PrefetchScalarGridSpec(
            num_scalar_prefetch=0,
            grid=(grid,),
            in_specs=[
                pl.BlockSpec((tb, lanes), lambda i: (i, 0)),   # logits tile
                pl.BlockSpec((tb, lanes), lambda i: (i, 0)),   # targets tile
                pl.BlockSpec((1, lanes), lambda i: (0, 0)),    # exp(1-ratio)
                pl.BlockSpec((1, lanes), lambda i: (0, 0)),    # exp(ratio)
            ],
            out_specs=pl.BlockSpec((1, 1, lanes), lambda i: (i, 0, 0)),
        ),
        compiler_params=pltpu.CompilerParams(
            dimension_semantics=("parallel",),
            vmem_limit_bytes=48 * 1024 * 1024,
        ),
        cost_estimate=cost,
    )(x2, t2, w_pos, w_neg)

    total = jnp.sum(partials)
    return total / B if size_average else total


def _reference(logits, targets, sample_weight):
    """Pure-JAX reference mirroring the PyTorch module, for verification."""
    x = logits.astype(jnp.float32)
    t = targets.astype(jnp.float32)
    loss = jnp.maximum(x, 0.0) - x * t + jnp.log1p(jnp.exp(-jnp.abs(x)))
    tmask = jnp.where(t > 0.5, 1.0, 0.0)
    ratio = jnp.asarray(sample_weight, jnp.float32)[None, :]
    w = jnp.exp((1.0 - tmask) * ratio + tmask * (1.0 - ratio))
    w = jnp.where(tmask > 1.0, 0.0, w)
    return jnp.sum(loss * w) / x.shape[0]


if __name__ == "__main__":
    key = jax.random.PRNGKey(0)
    k1, k2, k3 = jax.random.split(key, 3)

    # 1) lane-dense flat path (C divides 128, B*C divisible by 128)
    B, C = 8, 32
    logits = jax.random.normal(k1, (B, C), jnp.float32)
    targets = (jax.random.uniform(k2, (B, C)) > 0.5).astype(jnp.float32)
    sample_weight = jax.random.uniform(k3, (C,), jnp.float32,
                                       minval=0.05, maxval=0.95)
    loss = cel_sigmoid_loss(logits, targets, sample_weight)
    jax.block_until_ready(loss)
    ref = _reference(logits, targets, sample_weight)
    assert jnp.allclose(loss, ref, rtol=1e-5, atol=1e-5), (loss, ref)

    # 2) lane-padded (B, C) fallback path, odd shapes
    B2, C2 = 13, 26
    logits2 = jax.random.normal(k1, (B2, C2), jnp.float32)
    targets2 = (jax.random.uniform(k2, (B2, C2)) > 0.5).astype(jnp.float32)
    sample_weight2 = jax.random.uniform(k3, (C2,), jnp.float32,
                                        minval=0.05, maxval=0.95)
    loss2 = cel_sigmoid_loss(logits2, targets2, sample_weight2)
    jax.block_until_ready(loss2)
    ref2 = _reference(logits2, targets2, sample_weight2)
    assert jnp.allclose(loss2, ref2, rtol=1e-5, atol=1e-5), (loss2, ref2)

    # 3) multi-tile grid with a ragged last tile (exercises in-kernel mask +
    #    parallel grid); tiny block_bytes forces tb=8 over 12 flat rows.
    B3, C3 = 48, 32
    logits3 = jax.random.normal(k1, (B3, C3), jnp.float32)
    targets3 = (jax.random.uniform(k2, (B3, C3)) > 0.5).astype(jnp.float32)
    sample_weight3 = jax.random.uniform(k3, (C3,), jnp.float32,
                                        minval=0.05, maxval=0.95)
    loss3 = cel_sigmoid_loss(logits3, targets3, sample_weight3,
                             block_bytes=4096)
    jax.block_until_ready(loss3)
    ref3 = _reference(logits3, targets3, sample_weight3)
    assert jnp.allclose(loss3, ref3, rtol=1e-5, atol=1e-5), (loss3, ref3)

    print("KERNEL_OK")
</pallas_src>

<mosaic_0001>
module attributes {stable_mosaic.version = 11 : i64} {
  func.func @_cel_sigmoid_kernel(%arg0: i32, %arg1: memref<2x128xf32, #tpu.memory_space<vmem>>, %arg2: memref<2x128xf32, #tpu.memory_space<vmem>>, %arg3: memref<1x128xf32, #tpu.memory_space<vmem>>, %arg4: memref<1x128xf32, #tpu.memory_space<vmem>>, %arg5: memref<1x1x128xf32, #tpu.memory_space<vmem>>) attributes {dimension_semantics = [#tpu.dimension_semantics<parallel>], iteration_bounds = array<i64: 1>, scalar_prefetch = 0 : i64, scratch_operands = 0 : i64, tpu.core_type = #tpu.core_type<tc>, window_params = [{transform_indices = @transform_0, window_bounds = array<i64: 2, 128>}, {transform_indices = @transform_1, window_bounds = array<i64: 2, 128>}, {pipeline_mode = #tpu.pipeline_mode<synchronous>, transform_indices = @transform_2, window_bounds = array<i64: 1, 128>}, {pipeline_mode = #tpu.pipeline_mode<synchronous>, transform_indices = @transform_3, window_bounds = array<i64: 1, 128>}, {transform_indices = @transform_4, window_bounds = array<i64: 1, 1, 128>}]} {
    %c0 = arith.constant 0 : index
    %c0_0 = arith.constant 0 : index
    %0 = vector.load %arg1[%c0, %c0_0] : memref<2x128xf32, #tpu.memory_space<vmem>>, vector<2x128xf32>
    %c0_1 = arith.constant 0 : index
    %c0_2 = arith.constant 0 : index
    %1 = vector.load %arg2[%c0_1, %c0_2] : memref<2x128xf32, #tpu.memory_space<vmem>>, vector<2x128xf32>
    %cst = arith.constant 0.000000e+00 : f32
    %2 = vector.broadcast %cst : f32 to vector<2x128xf32>
    %3 = arith.maximumf %0, %2 : vector<2x128xf32>
    %4 = arith.mulf %0, %1 : vector<2x128xf32>
    %5 = arith.subf %3, %4 : vector<2x128xf32>
    %6 = math.absf %0 : vector<2x128xf32>
    %cst_3 = arith.constant 0.000000e+00 : f32
    %7 = vector.broadcast %cst_3 : f32 to vector<2x128xf32>
    %8 = arith.subf %7, %6 : vector<2x128xf32>
    %9 = math.exp %8 : vector<2x128xf32>
    %10 = math.log1p %9 : vector<2x128xf32>
    %11 = arith.addf %5, %10 : vector<2x128xf32>
    %cst_4 = arith.constant 5.000000e-01 : f32
    %12 = vector.broadcast %cst_4 : f32 to vector<2x128xf32>
    %13 = arith.cmpf ogt, %1, %12 : vector<2x128xf32>
    %c0_5 = arith.constant 0 : index
    %c0_6 = arith.constant 0 : index
    %14 = vector.load %arg3[%c0_5, %c0_6] : memref<1x128xf32, #tpu.memory_space<vmem>>, vector<1x128xf32>
    %c0_7 = arith.constant 0 : index
    %c0_8 = arith.constant 0 : index
    %15 = vector.load %arg4[%c0_7, %c0_8] : memref<1x128xf32, #tpu.memory_space<vmem>>, vector<1x128xf32>
    %16 = vector.shape_cast %14 : vector<1x128xf32> to vector<1x128xf32>
    %17 = vector.broadcast %16 : vector<1x128xf32> to vector<2x128xf32>
    %18 = vector.shape_cast %15 : vector<1x128xf32> to vector<1x128xf32>
    %19 = vector.broadcast %18 : vector<1x128xf32> to vector<2x128xf32>
    %20 = arith.select %13, %17, %19 : vector<2x128xi1>, vector<2x128xf32>
    %21 = arith.mulf %11, %20 : vector<2x128xf32>
    %cst_9 = arith.constant dense<0.000000e+00> : vector<128xf32>
    %22 = vector.multi_reduction <add>, %21, %cst_9 [0] : vector<2x128xf32> to vector<128xf32>
    %23 = vector.shape_cast %22 : vector<128xf32> to vector<1x128xf32>
    %24 = vector.shape_cast %23 : vector<1x128xf32> to vector<1x1x128xf32>
    %c0_10 = arith.constant 0 : index
    %c0_11 = arith.constant 0 : index
    %c0_12 = arith.constant 0 : index
    %25 = vector.load %arg5[%c0_10, %c0_11, %c0_12] : memref<1x1x128xf32, #tpu.memory_space<vmem>>, vector<1x1x128xf32>
    tpu.vector_store %arg5[%c0_10, %c0_11, %c0_12], %24 {strides = array<i32>} : memref<1x1x128xf32, #tpu.memory_space<vmem>>, vector<1x1x128xf32>,
    return
  }
  func.func @transform_0(%arg0: i32) -> (i32, i32) {
    %c0_i32 = arith.constant 0 : i32
    %c0_i32_0 = arith.constant 0 : i32
    return %arg0, %c0_i32 : i32, i32
  }
  func.func @transform_1(%arg0: i32) -> (i32, i32) {
    %c0_i32 = arith.constant 0 : i32
    %c0_i32_0 = arith.constant 0 : i32
    return %arg0, %c0_i32 : i32, i32
  }
  func.func @transform_2(%arg0: i32) -> (i32, i32) {
    %c0_i32 = arith.constant 0 : i32
    %c0_i32_0 = arith.constant 0 : i32
    %c0_i32_1 = arith.constant 0 : i32
    return %c0_i32, %c0_i32_0 : i32, i32
  }
  func.func @transform_3(%arg0: i32) -> (i32, i32) {
    %c0_i32 = arith.constant 0 : i32
    %c0_i32_0 = arith.constant 0 : i32
    %c0_i32_1 = arith.constant 0 : i32
    return %c0_i32, %c0_i32_0 : i32, i32
  }
  func.func @transform_4(%arg0: i32) -> (i32, i32, i32) {
    %c0_i32 = arith.constant 0 : i32
    %c0_i32_0 = arith.constant 0 : i32
    %c0_i32_1 = arith.constant 0 : i32
    return %arg0, %c0_i32, %c0_i32_0 : i32, i32, i32
  }
}

</mosaic_0001>

<llo_original>
// kernel: tpu_custom_call.1
$region0: #{tpu_custom_call.1}
  #allocation0 [shape = 'u32[]', space=smem, size = 0x4, offset = 0x4, fixed_abs, tag = 'smem constant byte address 0x4 - core index']
  #allocation1 [shape = 'u32[144,128]{1,0:T(1,128)}', space=vmem, size = 0x12000, scoped, tag = 'internal scratch']
  %s0 = inlined_call_operand.hbm [shape: f32[2,128], index: 0, kind: input, shape index: {}]
  %s1 = inlined_call_operand.hbm [shape: f32[2,128], index: 1, kind: input, shape index: {}]
  %s2 = inlined_call_operand.vmem [shape: f32[1,128], index: 2, kind: input, shape index: {}]
  %s3 = inlined_call_operand.vmem [shape: f32[1,128], index: 3, kind: input, shape index: {}]
  %s4 = inlined_call_operand.hbm [shape: f32[1,1,128], index: 4, kind: output, shape index: {}]
  %s5 = sld [smem:[#allocation0]]
  $region34: #{tpu_custom_call.1} parent=0
    _
  %s7 = ssub.s32 1, %s5
  %s8 = scalar_select 0, %s7, %s5
  $region1: #{tpu_custom_call.1} parent=0
    #allocation2 [shape = 'u8[1024]{0}', space=vmem, size = 0x400, scoped, tag = 'input window, operand 0, single buffered']
    #allocation3 [shape = 's32[1]{0}', space=sflag, size = 0x4, scoped, tag = 'scoped memory for tpu_custom_call.1']
    #allocation4 [shape = 's32[1]{0}', space=sflag, size = 0x4, scoped, tag = 'scoped memory for tpu_custom_call.1']
    #allocation5 [shape = 'u8[1024]{0}', space=vmem, size = 0x400, scoped, tag = 'input window, operand 1, single buffered']
    #allocation6 [shape = 's32[1]{0}', space=sflag, size = 0x4, scoped, tag = 'scoped memory for tpu_custom_call.1']
    #allocation7 [shape = 'u8[512]{0}', space=vmem, size = 0x400, scoped, tag = 'output window, operand 0, single buffered']
    %9 = vsyncpa [#allocation3], 0
    %10 = vsyncpa [#allocation6], 0
    %11 = vsyncpa [#allocation4], 0
    // Predicated region
    $region2: #{tpu_custom_call.1} parent=1 // pred_check
      _
    $region3: #{tpu_custom_call.1} parent=1 // pred_check_branch
      %13 = sbr.rel (0) target = $region5
    $region4: #{tpu_custom_call.1} parent=1 // pred_region
      %s15 = ssub.s32 32, 32
      %16 = vsyncadd [#allocation3], %s15
      %s18 = sshll.u32 [#allocation2], 4
      %s19 = int_to_ptr.vmem [resolvable:$true] %s18
      %21 = dma.hbm_to_vmem [thread:$0]  %s0, 32, %s19, [#allocation3]
    $region5: #{tpu_custom_call.1} parent=1 // pred_fallthru
      _
    // Predicated region
    $region6: #{tpu_custom_call.1} parent=1 // pred_check
      _
    $region7: #{tpu_custom_call.1} parent=1 // pred_check_branch
      %23 = sbr.rel (0) target = $region9
    $region8: #{tpu_custom_call.1} parent=1 // pred_region
      %s25 = ssub.s32 32, 32
      %26 = vsyncadd [#allocation6], %s25
      %s28 = sshll.u32 [#allocation5], 4
      %s29 = int_to_ptr.vmem [resolvable:$true] %s28
      %31 = dma.hbm_to_vmem [thread:$0]  %s1, 32, %s29, [#allocation6]
    $region9: #{tpu_custom_call.1} parent=1 // pred_fallthru
      _
    // Predicated region
    $region10: #{tpu_custom_call.1} parent=1 // pred_check
      _
    $region11: #{tpu_custom_call.1} parent=1 // pred_check_branch
      %33 = sbr.rel (0) target = $region13
    $region12: #{tpu_custom_call.1} parent=1 // pred_region
      _
    $region13: #{tpu_custom_call.1} parent=1 // pred_fallthru
      _
    // Predicated region
    $region14: #{tpu_custom_call.1} parent=1 // pred_check
      _
    $region15: #{tpu_custom_call.1} parent=1 // pred_check_branch
      %35 = sbr.rel (0) target = $region17
    $region16: #{tpu_custom_call.1} parent=1 // pred_region
      _
    $region17: #{tpu_custom_call.1} parent=1 // pred_fallthru
      _
    // Predicated region
    $region18: #{tpu_custom_call.1} parent=1 // pred_check
      _
    $region19: #{tpu_custom_call.1} parent=1 // pred_check_branch
      %37 = sbr.rel (0) target = $region21
    $region20: #{tpu_custom_call.1} parent=1 // pred_region
      %38 = dma.done [#allocation3], 32
    $region21: #{tpu_custom_call.1} parent=1 // pred_fallthru
      _
    // Predicated region
    $region22: #{tpu_custom_call.1} parent=1 // pred_check
      _
    $region23: #{tpu_custom_call.1} parent=1 // pred_check_branch
      %40 = sbr.rel (0) target = $region25
    $region24: #{tpu_custom_call.1} parent=1 // pred_region
      %41 = dma.done [#allocation6], 32
    $region25: #{tpu_custom_call.1} parent=1 // pred_fallthru
      _
    %v42 = vld [vmem:[#allocation2] sm:$0x3]
    %v43 = vld [vmem:[#allocation5] sm:$0x3]
    %v44 = vmax.f32 %v42, 0.0
    %v45 = vmul.f32 %v42, %v43
    %v46 = vsub.f32 %v44, %v45
    %v47 = vand.u32 2147483647, %v42
    %v48 = vsub.f32 0.0, %v47
    %v49 = vmul.f32 %v48, 1.442695
    %v50 = vpow.pop %v49
    %v51 = vadd.f32 %v50, 1.0
    %v52 = vlog2.pop %v51
    %v53 = vmul.f32 %v52, 0.6931472
    %v54 = vmul.f32 -0.5, %v50
    %v55 = vadd.f32 %v54, 1.0
    %v56 = vmul.f32 %v55, %v50
    %v57 = vand.u32 2147483647, %v50
    %vm58 = vcmp.lt.f32.partialorder %v57, 0.0004427343
    %v59 = vsel %vm58, %v56, %v53
    %v60 = vadd.f32 %v46, %v59
    %vm61 = vcmp.gt.f32.partialorder %v43, 0.5
    %v62 = vld [vmem:[%s2] sm:$0x1]
    %v63 = vld [vmem:[%s3] sm:$0x1]
    %v65 = vlaneseq
    %v66 = vshrl.u32 %v65, 7
    %v67 = vsub.s32 0, %v66
    %v68 = vrot.slane %v62, %v67
    %v71 = vlaneseq
    %v72 = vshrl.u32 %v71, 7
    %v73 = vsub.s32 0, %v72
    %v74 = vrot.slane %v63, %v73
    %v76 = vsel %vm61, %v68, %v74
    %v77 = vmul.f32 %v60, %v76
    %vm78 = vcmask 1041408
    %v79 = vsel %vm78, %v77, 0.0
    %v80 = vrot.slane %v79, 4
    %v81 = vadd.f32 %v79, %v80
    %v82 = vrot.slane %v81, 2
    %v83 = vadd.f32 %v81, %v82
    %v84 = vrot.slane %v83, 1
    %v85 = vadd.f32 %v83, %v84
    %86 = vst [vmem:[#allocation7] sm:$0x1] %v85
    // Predicated region
    $region26: #{tpu_custom_call.1} parent=1 // pred_check
      _
    $region27: #{tpu_custom_call.1} parent=1 // pred_check_branch
      %88 = sbr.rel (0) target = $region29
    $region28: #{tpu_custom_call.1} parent=1 // pred_region
      %s90 = ssub.s32 16, 16
      %91 = vsyncadd [#allocation4], %s90
      %s93 = sshll.u32 [#allocation7], 4
      %s94 = int_to_ptr.vmem [resolvable:$true] %s93
      %96 = dma.vmem_to_hbm [thread:$0]  %s94, 16, %s4, [#allocation4]
    $region29: #{tpu_custom_call.1} parent=1 // pred_fallthru
      _
    // Predicated region
    $region30: #{tpu_custom_call.1} parent=1 // pred_check
      _
    $region31: #{tpu_custom_call.1} parent=1 // pred_check_branch
      %98 = sbr.rel (0) target = $region33
    $region32: #{tpu_custom_call.1} parent=1 // pred_region
      %99 = dma.done [#allocation4], 16
    $region33: #{tpu_custom_call.1} parent=1 // pred_fallthru
      _
    %100 = vsyncpa [#allocation3], 1
    %101 = vsyncpa [#allocation6], 1
    %102 = vsyncpa [#allocation4], 1

</llo_original>
